<compile_context>
chip_gen: v7x
topology: tpu7x:2x2x1
jax: 0.10.0
libtpu: 0.0.40
codegen_flags: <defaults>
</compile_context>

<pallas_src>
import functools

import jax
import jax.numpy as jnp
from jax.experimental import pallas as pl
from jax.experimental.pallas import tpu as pltpu

STATS_LANES = 128  # lane-dense per-sample stats slab (col0=rec, col1=kl, col2=ddpm)


def vae_ddpm_kernel(inv_nz, nzp, d,
                    # inputs
                    x_ref, y_ref, rand_ref,
                    wenc_ref, benc_ref,
                    wfused_ref, bfused_ref,
                    w2_ref, b2_ref,
                    # output: [latent_z | mu | stats], all lane-aligned
                    out_ref):
    nzp2 = 2 * nzp
    eps = rand_ref[:, :nzp]      # reparameterization noise (lane-aligned slice)
    noise = rand_ref[:, nzp:]    # ddpm noise

    # ---------------- model_vae: fused encoder (one bf16 MXU matmul) -------
    enc = jnp.dot(x_ref[...].astype(jnp.bfloat16), wenc_ref[...],
                  preferred_element_type=jnp.float32) + benc_ref[...]
    mu = enc[:, :nzp]            # padded cols are exactly 0
    logvar = enc[:, nzp:]        # padded cols are exactly 0
    std = jnp.exp(0.5 * logvar)
    var = std * std              # == exp(logvar); reuse the EUP pass
    latent_z = mu + std * eps    # padded cols: 0 + 1*0 = 0

    # Early lane-aligned sub-stores (no concat temp, short live ranges).
    out_ref[:, :nzp] = latent_z
    out_ref[:, nzp:nzp2] = mu

    # ------- fused decoder + ddpm layer-1: [z | noise] @ W_fused -----------
    # W_fused = [[w_dec, sqrt_ab*w1], [0, sqrt_1mab*w1]]  (prepared in wrapper)
    zn = jnp.concatenate([latent_z, noise], axis=-1).astype(jnp.bfloat16)
    dec_h = jnp.dot(zn, wfused_ref[...],
                    preferred_element_type=jnp.float32) + bfused_ref[...]
    x_rec = dec_h[:, :d]
    h = jnp.tanh(dec_h[:, d:])   # padded cols: tanh(0) = 0

    # ---------------- per-sample losses (fp32) ------------------------------
    diff = x_rec - y_ref[...]
    loss_rec = jnp.sum(diff * diff, axis=-1, keepdims=True)           # (Bt,1)
    # padded latent cols contribute 1 + 0 - 0 - 1 = 0 to the KL sum
    loss_kl = -0.5 * jnp.sum(1.0 + logvar - mu * mu - var,
                             axis=-1, keepdims=True)                  # (Bt,1)

    # ---------------- ddpm layer-2 + eps-prediction loss --------------------
    pred = jnp.dot(h.astype(jnp.bfloat16), w2_ref[...],
                   preferred_element_type=jnp.float32) + b2_ref[...]
    derr = pred - noise          # padded cols are 0
    # mean over the TRUE latent dim (padded cols contribute 0 to the sum)
    ddpm_loss = jnp.sum(derr * derr, axis=-1, keepdims=True) * inv_nz  # (Bt,1)

    # ---------------- lane-dense stats sub-store -----------------------------
    bt = x_ref.shape[0]
    lane = jax.lax.broadcasted_iota(jnp.int32, (bt, STATS_LANES), 1)
    out_ref[:, nzp2:] = jnp.where(
        lane == 0, loss_rec,
        jnp.where(lane == 1, loss_kl,
                  jnp.where(lane == 2, ddpm_loss, 0.0)))


def _pick_batch_tile(B, max_tile=512):
    # Largest multiple-of-8 divisor of B that is <= max_tile, preferring a
    # tile that leaves >= 2 grid steps (engages both v7x TensorCores via the
    # "parallel" batch axis).  max_tile=512 keeps double-buffered activation
    # blocks well under v5e's 16 MiB scoped-VMEM default.
    cands = [t for t in range(8, min(B, max_tile) + 1, 8) if B % t == 0]
    if not cands:
        return B
    multi = [t for t in cands if B // t >= 2]
    return max(multi) if multi else max(cands)


def vae_ddpm_forward(x, labels, params, eps, noise, *,
                     alpha_bar=0.7, ddpm_weight=1.0, nt=1000.0):
    B, D = x.shape
    NZ = params["w_mu"].shape[1]
    H = params["w1"].shape[1]
    NZP = ((NZ + 127) // 128) * 128          # lane-dense latent dim
    HP = ((H + 127) // 128) * 128            # lane-dense ddpm hidden dim
    sa = float(alpha_bar) ** 0.5
    s1 = float(1.0 - alpha_bar) ** 0.5

    def padcols(w, to):  # pad last dim -> `to` with zeros
        return jnp.pad(w, ((0, 0), (0, to - w.shape[1])))

    def padrows(w, to):  # pad first dim -> `to` with zeros
        return jnp.pad(w, ((0, to - w.shape[0]), (0, 0)))

    # Fused + padded parameters (layout plumbing, done once in the wrapper).
    # Weights go to bf16 (native MXU format); biases + loss math stay fp32.
    w_enc = jnp.concatenate([padcols(params["w_mu"], NZP),
                             padcols(params["w_lv"], NZP)], axis=1).astype(jnp.bfloat16)
    b_enc = jnp.concatenate([padcols(params["b_mu"], NZP),
                             padcols(params["b_lv"], NZP)], axis=1)

    w_dec_p = padrows(params["w_dec"], NZP)                       # (NZP, D)
    w1_p = padcols(padrows(params["w1"], NZP), HP)                # (NZP, HP)
    # W_fused = [[w_dec, sa*w1], [0, s1*w1]]  -> (2*NZP, D + HP)
    w_fused = jnp.concatenate(
        [jnp.concatenate([w_dec_p, sa * w1_p], axis=1),
         jnp.concatenate([jnp.zeros((NZP, D), jnp.float32), s1 * w1_p], axis=1)],
        axis=0).astype(jnp.bfloat16)
    b_fused = jnp.concatenate([params["b_dec"], padcols(params["b1"], HP)], axis=1)

    w2 = padcols(padrows(params["w2"], HP), NZP).astype(jnp.bfloat16)  # (HP, NZP)
    b2 = padcols(params["b2"], NZP)

    rand = jnp.concatenate([padcols(eps, NZP), padcols(noise, NZP)], axis=1)  # (B, 2*NZP)

    kernel = functools.partial(vae_ddpm_kernel, 1.0 / float(NZ), NZP, D)

    # Batch grid: weights stay resident (index_map -> (0,0)), activations and
    # the packed output pipeline over batch tiles; batch axis is "parallel".
    assert B % 8 == 0, "batch must be a multiple of 8"
    B_tile = _pick_batch_tile(B)
    grid = (B // B_tile,)

    OUT_W = 2 * NZP + STATS_LANES
    act = lambda i: (i, 0)
    rep = lambda i: (0, 0)
    in_specs = [
        pl.BlockSpec((B_tile, D), act),            # x
        pl.BlockSpec((B_tile, D), act),            # labels
        pl.BlockSpec((B_tile, 2 * NZP), act),      # rand = [eps | noise]
        pl.BlockSpec((D, 2 * NZP), rep),           # w_enc  (bf16)
        pl.BlockSpec((1, 2 * NZP), rep),           # b_enc
        pl.BlockSpec((2 * NZP, D + HP), rep),      # w_fused (bf16)
        pl.BlockSpec((1, D + HP), rep),            # b_fused
        pl.BlockSpec((HP, NZP), rep),              # w2 (bf16)
        pl.BlockSpec((1, NZP), rep),               # b2
    ]
    out_specs = pl.BlockSpec((B_tile, OUT_W), act)  # packed [z | mu | stats]
    out_shape = jax.ShapeDtypeStruct((B, OUT_W), jnp.float32)

    fn = pl.pallas_call(
        kernel,
        grid=grid,
        in_specs=in_specs,
        out_specs=out_specs,
        out_shape=out_shape,
        compiler_params=pltpu.CompilerParams(
            dimension_semantics=("parallel",)),
    )
    out = fn(x, labels, rand, w_enc, b_enc, w_fused, b_fused, w2, b2)

    # ---- wrapper-side unpacking + scalar loss (loss_weight is a constant) ----
    latent_z = out[:, :NZ]
    mu = out[:, NZP:NZP + NZ]
    loss_rec = out[:, 2 * NZP:2 * NZP + 1]
    loss_kl = out[:, 2 * NZP + 1:2 * NZP + 2]
    ddpm_loss = out[:, 2 * NZP + 2:2 * NZP + 3]
    loss_per_sample = loss_rec + loss_kl

    # TODO(synk): real ddpm loss_weight is per-sample/per-timestep; fixed
    # timestep stand-in makes it the compile-time constant (1 - alpha_bar).
    lw = 1.0 - float(alpha_bar)
    loss_weight = jnp.full((B, 1), lw, jnp.float32)

    if ddpm_weight > 0:
        loss = ((1.0 / (lw * float(nt))) * jnp.mean(loss_per_sample)
                + float(ddpm_weight) * jnp.mean(ddpm_loss))
    else:
        loss = jnp.mean(loss_per_sample)   # + 0.0 * ddpm_loss.mean() (dead)

    return loss_rec, loss_kl, loss, latent_z, mu, ddpm_loss, loss_weight


if __name__ == "__main__":
    B, D, NZ, H = 8, 128, 64, 128
    key = jax.random.PRNGKey(0)
    ks = jax.random.split(key, 10)

    x = jax.random.normal(ks[0], (B, D), jnp.float32)
    labels = x  # reconstruction target

    params = dict(
        w_mu=0.05 * jax.random.normal(ks[1], (D, NZ), jnp.float32),
        b_mu=jnp.zeros((1, NZ), jnp.float32),
        w_lv=0.05 * jax.random.normal(ks[2], (D, NZ), jnp.float32),
        b_lv=jnp.zeros((1, NZ), jnp.float32),
        w_dec=0.05 * jax.random.normal(ks[3], (NZ, D), jnp.float32),
        b_dec=jnp.zeros((1, D), jnp.float32),
        w1=0.05 * jax.random.normal(ks[4], (NZ, H), jnp.float32),
        b1=jnp.zeros((1, H), jnp.float32),
        w2=0.05 * jax.random.normal(ks[5], (H, NZ), jnp.float32),
        b2=jnp.zeros((1, NZ), jnp.float32),
    )
    eps = jax.random.normal(ks[6], (B, NZ), jnp.float32)     # reparam noise
    noise = jax.random.normal(ks[7], (B, NZ), jnp.float32)   # ddpm noise

    outs = vae_ddpm_forward(x, labels, params, eps, noise,
                            alpha_bar=0.7, ddpm_weight=1.0, nt=1000.0)
    jax.block_until_ready(outs)

    loss_rec, loss_kl, loss, latent_z, mu, ddpm_loss, loss_weight = outs
    assert loss_rec.shape == (B, 1) and loss_kl.shape == (B, 1)
    assert loss.shape == ()
    assert latent_z.shape == (B, NZ) and mu.shape == (B, NZ)
    assert ddpm_loss.shape == (B, 1) and loss_weight.shape == (B, 1)
    assert all(bool(jnp.isfinite(o).all()) for o in outs)
    print("KERNEL_OK")
</pallas_src>

<mosaic_0001>
module attributes {stable_mosaic.version = 11 : i64} {
  func.func @vae_ddpm_kernel(%arg0: i32, %arg1: memref<8x128xf32, #tpu.memory_space<vmem>>, %arg2: memref<8x128xf32, #tpu.memory_space<vmem>>, %arg3: memref<8x256xf32, #tpu.memory_space<vmem>>, %arg4: memref<128x256xbf16, #tpu.memory_space<vmem>>, %arg5: memref<1x256xf32, #tpu.memory_space<vmem>>, %arg6: memref<256x256xbf16, #tpu.memory_space<vmem>>, %arg7: memref<1x256xf32, #tpu.memory_space<vmem>>, %arg8: memref<128x128xbf16, #tpu.memory_space<vmem>>, %arg9: memref<1x128xf32, #tpu.memory_space<vmem>>, %arg10: memref<8x384xf32, #tpu.memory_space<vmem>>) attributes {dimension_semantics = [#tpu.dimension_semantics<parallel>], iteration_bounds = array<i64: 1>, scalar_prefetch = 0 : i64, scratch_operands = 0 : i64, tpu.core_type = #tpu.core_type<tc>, window_params = [{transform_indices = @transform_0, window_bounds = array<i64: 8, 128>}, {transform_indices = @transform_1, window_bounds = array<i64: 8, 128>}, {transform_indices = @transform_2, window_bounds = array<i64: 8, 256>}, {pipeline_mode = #tpu.pipeline_mode<synchronous>, transform_indices = @transform_3, window_bounds = array<i64: 128, 256>}, {pipeline_mode = #tpu.pipeline_mode<synchronous>, transform_indices = @transform_4, window_bounds = array<i64: 1, 256>}, {pipeline_mode = #tpu.pipeline_mode<synchronous>, transform_indices = @transform_5, window_bounds = array<i64: 256, 256>}, {pipeline_mode = #tpu.pipeline_mode<synchronous>, transform_indices = @transform_6, window_bounds = array<i64: 1, 256>}, {pipeline_mode = #tpu.pipeline_mode<synchronous>, transform_indices = @transform_7, window_bounds = array<i64: 128, 128>}, {pipeline_mode = #tpu.pipeline_mode<synchronous>, transform_indices = @transform_8, window_bounds = array<i64: 1, 128>}, {transform_indices = @transform_9, window_bounds = array<i64: 8, 384>}]} {
    %c0 = arith.constant 0 : index
    %c0_0 = arith.constant 0 : index
    %0 = vector.load %arg3[%c0, %c0_0] : memref<8x256xf32, #tpu.memory_space<vmem>>, vector<8x128xf32>
    %c0_1 = arith.constant 0 : index
    %c128 = arith.constant 128 : index
    %1 = vector.load %arg3[%c0_1, %c128] : memref<8x256xf32, #tpu.memory_space<vmem>>, vector<8x128xf32>
    %c0_2 = arith.constant 0 : index
    %c0_3 = arith.constant 0 : index
    %2 = vector.load %arg1[%c0_2, %c0_3] : memref<8x128xf32, #tpu.memory_space<vmem>>, vector<8x128xf32>
    %3 = arith.truncf %2 : vector<8x128xf32> to vector<8x128xbf16>
    %c0_4 = arith.constant 0 : index
    %c0_5 = arith.constant 0 : index
    %4 = vector.load %arg4[%c0_4, %c0_5] : memref<128x256xbf16, #tpu.memory_space<vmem>>, vector<128x256xbf16>
    %cst = arith.constant dense<0.000000e+00> : vector<8x256xf32>
    %5 = tpu.matmul %3, %4, %cst {dimension_numbers = #tpu.dot_dimension_numbers<[1], [0], [0], [1], [0, 0, 1, 1], [], []>} : vector<8x128xbf16>, vector<128x256xbf16>, vector<8x256xf32> -> vector<8x256xf32>
    %c0_6 = arith.constant 0 : index
    %c0_7 = arith.constant 0 : index
    %6 = vector.load %arg5[%c0_6, %c0_7] : memref<1x256xf32, #tpu.memory_space<vmem>>, vector<1x256xf32>
    %7 = vector.broadcast %6 : vector<1x256xf32> to vector<8x256xf32>
    %8 = arith.addf %5, %7 : vector<8x256xf32>
    %9 = vector.extract_strided_slice %8 {offsets = [0, 0], sizes = [8, 128], strides = [1, 1]} : vector<8x256xf32> to vector<8x128xf32>
    %10 = vector.extract_strided_slice %8 {offsets = [0, 128], sizes = [8, 128], strides = [1, 1]} : vector<8x256xf32> to vector<8x128xf32>
    %cst_8 = arith.constant 5.000000e-01 : f32
    %11 = vector.broadcast %cst_8 : f32 to vector<8x128xf32>
    %12 = arith.mulf %11, %10 : vector<8x128xf32>
    %13 = math.exp %12 : vector<8x128xf32>
    %14 = arith.mulf %13, %13 : vector<8x128xf32>
    %15 = arith.mulf %13, %0 : vector<8x128xf32>
    %16 = arith.addf %9, %15 : vector<8x128xf32>
    %c0_9 = arith.constant 0 : index
    %c0_10 = arith.constant 0 : index
    %17 = vector.load %arg10[%c0_9, %c0_10] : memref<8x384xf32, #tpu.memory_space<vmem>>, vector<8x128xf32>
    tpu.vector_store %arg10[%c0_9, %c0_10], %16 {strides = array<i32>} : memref<8x384xf32, #tpu.memory_space<vmem>>, vector<8x128xf32>,
    %c0_11 = arith.constant 0 : index
    %c128_12 = arith.constant 128 : index
    %18 = vector.load %arg10[%c0_11, %c128_12] : memref<8x384xf32, #tpu.memory_space<vmem>>, vector<8x128xf32>
    tpu.vector_store %arg10[%c0_11, %c128_12], %9 {strides = array<i32>} : memref<8x384xf32, #tpu.memory_space<vmem>>, vector<8x128xf32>,
    %19 = tpu.concatenate %16, %1 in 1 : vector<8x128xf32>, vector<8x128xf32> -> vector<8x256xf32>
    %20 = arith.truncf %19 : vector<8x256xf32> to vector<8x256xbf16>
    %c0_13 = arith.constant 0 : index
    %c0_14 = arith.constant 0 : index
    %21 = vector.load %arg6[%c0_13, %c0_14] : memref<256x256xbf16, #tpu.memory_space<vmem>>, vector<256x256xbf16>
    %cst_15 = arith.constant dense<0.000000e+00> : vector<8x256xf32>
    %22 = tpu.matmul %20, %21, %cst_15 {dimension_numbers = #tpu.dot_dimension_numbers<[1], [0], [0], [1], [0, 0, 1, 1], [], []>} : vector<8x256xbf16>, vector<256x256xbf16>, vector<8x256xf32> -> vector<8x256xf32>
    %c0_16 = arith.constant 0 : index
    %c0_17 = arith.constant 0 : index
    %23 = vector.load %arg7[%c0_16, %c0_17] : memref<1x256xf32, #tpu.memory_space<vmem>>, vector<1x256xf32>
    %24 = vector.broadcast %23 : vector<1x256xf32> to vector<8x256xf32>
    %25 = arith.addf %22, %24 : vector<8x256xf32>
    %26 = vector.extract_strided_slice %25 {offsets = [0, 0], sizes = [8, 128], strides = [1, 1]} : vector<8x256xf32> to vector<8x128xf32>
    %27 = vector.extract_strided_slice %25 {offsets = [0, 128], sizes = [8, 128], strides = [1, 1]} : vector<8x256xf32> to vector<8x128xf32>
    %28 = math.tanh %27 : vector<8x128xf32>
    %c0_18 = arith.constant 0 : index
    %c0_19 = arith.constant 0 : index
    %29 = vector.load %arg2[%c0_18, %c0_19] : memref<8x128xf32, #tpu.memory_space<vmem>>, vector<8x128xf32>
    %30 = arith.subf %26, %29 : vector<8x128xf32>
    %31 = arith.mulf %30, %30 : vector<8x128xf32>
    %cst_20 = arith.constant dense<0.000000e+00> : vector<8xf32>
    %32 = vector.multi_reduction <add>, %31, %cst_20 [1] : vector<8x128xf32> to vector<8xf32>
    %33 = vector.shape_cast %32 : vector<8xf32> to vector<8x1xf32>
    %cst_21 = arith.constant 1.000000e+00 : f32
    %34 = vector.broadcast %cst_21 : f32 to vector<8x128xf32>
    %35 = arith.addf %34, %10 : vector<8x128xf32>
    %36 = arith.mulf %9, %9 : vector<8x128xf32>
    %37 = arith.subf %35, %36 : vector<8x128xf32>
    %38 = arith.subf %37, %14 : vector<8x128xf32>
    %cst_22 = arith.constant dense<0.000000e+00> : vector<8xf32>
    %39 = vector.multi_reduction <add>, %38, %cst_22 [1] : vector<8x128xf32> to vector<8xf32>
    %40 = vector.shape_cast %39 : vector<8xf32> to vector<8x1xf32>
    %cst_23 = arith.constant -5.000000e-01 : f32
    %41 = vector.broadcast %cst_23 : f32 to vector<8x1xf32>
    %42 = arith.mulf %41, %40 : vector<8x1xf32>
    %43 = arith.truncf %28 : vector<8x128xf32> to vector<8x128xbf16>
    %c0_24 = arith.constant 0 : index
    %c0_25 = arith.constant 0 : index
    %44 = vector.load %arg8[%c0_24, %c0_25] : memref<128x128xbf16, #tpu.memory_space<vmem>>, vector<128x128xbf16>
    %cst_26 = arith.constant dense<0.000000e+00> : vector<8x128xf32>
    %45 = tpu.matmul %43, %44, %cst_26 {dimension_numbers = #tpu.dot_dimension_numbers<[1], [0], [0], [1], [0, 0, 1, 1], [], []>} : vector<8x128xbf16>, vector<128x128xbf16>, vector<8x128xf32> -> vector<8x128xf32>
    %c0_27 = arith.constant 0 : index
    %c0_28 = arith.constant 0 : index
    %46 = vector.load %arg9[%c0_27, %c0_28] : memref<1x128xf32, #tpu.memory_space<vmem>>, vector<1x128xf32>
    %47 = vector.broadcast %46 : vector<1x128xf32> to vector<8x128xf32>
    %48 = arith.addf %45, %47 : vector<8x128xf32>
    %49 = arith.subf %48, %1 : vector<8x128xf32>
    %50 = arith.mulf %49, %49 : vector<8x128xf32>
    %cst_29 = arith.constant dense<0.000000e+00> : vector<8xf32>
    %51 = vector.multi_reduction <add>, %50, %cst_29 [1] : vector<8x128xf32> to vector<8xf32>
    %52 = vector.shape_cast %51 : vector<8xf32> to vector<8x1xf32>
    %cst_30 = arith.constant 1.562500e-02 : f32
    %53 = vector.broadcast %cst_30 : f32 to vector<8x1xf32>
    %54 = arith.mulf %52, %53 : vector<8x1xf32>
    %55 = tpu.iota {dimensions = array<i32: 1>} : vector<8x128xi32>
    %c0_i32 = arith.constant 0 : i32
    %56 = vector.broadcast %c0_i32 : i32 to vector<8x128xi32>
    %57 = arith.cmpi eq, %55, %56 : vector<8x128xi32>
    %c1_i32 = arith.constant 1 : i32
    %58 = vector.broadcast %c1_i32 : i32 to vector<8x128xi32>
    %59 = arith.cmpi eq, %55, %58 : vector<8x128xi32>
    %c2_i32 = arith.constant 2 : i32
    %60 = vector.broadcast %c2_i32 : i32 to vector<8x128xi32>
    %61 = arith.cmpi eq, %55, %60 : vector<8x128xi32>
    %cst_31 = arith.constant 0.000000e+00 : f32
    %62 = vector.shape_cast %54 : vector<8x1xf32> to vector<8x1xf32>
    %63 = vector.broadcast %62 : vector<8x1xf32> to vector<8x128xf32>
    %64 = vector.broadcast %cst_31 : f32 to vector<8x128xf32>
    %65 = arith.select %61, %63, %64 : vector<8x128xi1>, vector<8x128xf32>
    %66 = vector.shape_cast %42 : vector<8x1xf32> to vector<8x1xf32>
    %67 = vector.broadcast %66 : vector<8x1xf32> to vector<8x128xf32>
    %68 = arith.select %59, %67, %65 : vector<8x128xi1>, vector<8x128xf32>
    %69 = vector.shape_cast %33 : vector<8x1xf32> to vector<8x1xf32>
    %70 = vector.broadcast %69 : vector<8x1xf32> to vector<8x128xf32>
    %71 = arith.select %57, %70, %68 : vector<8x128xi1>, vector<8x128xf32>
    %c0_32 = arith.constant 0 : index
    %c256 = arith.constant 256 : index
    %72 = vector.load %arg10[%c0_32, %c256] : memref<8x384xf32, #tpu.memory_space<vmem>>, vector<8x128xf32>
    tpu.vector_store %arg10[%c0_32, %c256], %71 {strides = array<i32>} : memref<8x384xf32, #tpu.memory_space<vmem>>, vector<8x128xf32>,
    return
  }
  func.func @transform_0(%arg0: i32) -> (i32, i32) {
    %c0_i32 = arith.constant 0 : i32
    %c0_i32_0 = arith.constant 0 : i32
    return %arg0, %c0_i32 : i32, i32
  }
  func.func @transform_1(%arg0: i32) -> (i32, i32) {
    %c0_i32 = arith.constant 0 : i32
    %c0_i32_0 = arith.constant 0 : i32
    return %arg0, %c0_i32 : i32, i32
  }
  func.func @transform_2(%arg0: i32) -> (i32, i32) {
    %c0_i32 = arith.constant 0 : i32
    %c0_i32_0 = arith.constant 0 : i32
    return %arg0, %c0_i32 : i32, i32
  }
  func.func @transform_3(%arg0: i32) -> (i32, i32) {
    %c0_i32 = arith.constant 0 : i32
    %c0_i32_0 = arith.constant 0 : i32
    %c0_i32_1 = arith.constant 0 : i32
    return %c0_i32, %c0_i32_0 : i32, i32
  }
  func.func @transform_4(%arg0: i32) -> (i32, i32) {
    %c0_i32 = arith.constant 0 : i32
    %c0_i32_0 = arith.constant 0 : i32
    %c0_i32_1 = arith.constant 0 : i32
    return %c0_i32, %c0_i32_0 : i32, i32
  }
  func.func @transform_5(%arg0: i32) -> (i32, i32) {
    %c0_i32 = arith.constant 0 : i32
    %c0_i32_0 = arith.constant 0 : i32
    %c0_i32_1 = arith.constant 0 : i32
    return %c0_i32, %c0_i32_0 : i32, i32
  }
  func.func @transform_6(%arg0: i32) -> (i32, i32) {
    %c0_i32 = arith.constant 0 : i32
    %c0_i32_0 = arith.constant 0 : i32
    %c0_i32_1 = arith.constant 0 : i32
    return %c0_i32, %c0_i32_0 : i32, i32
  }
  func.func @transform_7(%arg0: i32) -> (i32, i32) {
    %c0_i32 = arith.constant 0 : i32
    %c0_i32_0 = arith.constant 0 : i32
    %c0_i32_1 = arith.constant 0 : i32
    return %c0_i32, %c0_i32_0 : i32, i32
  }
  func.func @transform_8(%arg0: i32) -> (i32, i32) {
    %c0_i32 = arith.constant 0 : i32
    %c0_i32_0 = arith.constant 0 : i32
    %c0_i32_1 = arith.constant 0 : i32
    return %c0_i32, %c0_i32_0 : i32, i32
  }
  func.func @transform_9(%arg0: i32) -> (i32, i32) {
    %c0_i32 = arith.constant 0 : i32
    %c0_i32_0 = arith.constant 0 : i32
    return %arg0, %c0_i32 : i32, i32
  }
}

</mosaic_0001>

<llo_original>
// kernel: tpu_custom_call.1
$region0: #{tpu_custom_call.1}
  #allocation0 [shape = 'u32[]', space=smem, size = 0x4, offset = 0x4, fixed_abs, tag = 'smem constant byte address 0x4 - core index']
  #allocation1 [shape = 'u32[144,128]{1,0:T(1,128)}', space=vmem, size = 0x12000, scoped, tag = 'internal scratch']
  %s0 = inlined_call_operand.hbm [shape: f32[8,128], index: 0, kind: input, shape index: {}]
  %s1 = inlined_call_operand.hbm [shape: f32[8,128], index: 1, kind: input, shape index: {}]
  %s2 = inlined_call_operand.hbm [shape: f32[8,256], index: 2, kind: input, shape index: {}]
  %s3 = inlined_call_operand.hbm [shape: bf16[128,256], index: 3, kind: input, shape index: {}]
  %s4 = inlined_call_operand.vmem [shape: f32[1,256], index: 4, kind: input, shape index: {}]
  %s5 = inlined_call_operand.hbm [shape: bf16[256,256], index: 5, kind: input, shape index: {}]
  %s6 = inlined_call_operand.vmem [shape: f32[1,256], index: 6, kind: input, shape index: {}]
  %s7 = inlined_call_operand.hbm [shape: bf16[128,128], index: 7, kind: input, shape index: {}]
  %s8 = inlined_call_operand.vmem [shape: f32[1,128], index: 8, kind: input, shape index: {}]
  %s9 = inlined_call_operand.hbm [shape: f32[8,384], index: 9, kind: output, shape index: {}]
  %s10 = sld [smem:[#allocation0]]
  $region70: #{tpu_custom_call.1} parent=0
    _
  %s12 = ssub.s32 1, %s10
  %s13 = scalar_select 0, %s12, %s10
  $region1: #{tpu_custom_call.1} parent=0
    #allocation2 [shape = 'u8[4096]{0}', space=vmem, size = 0x1000, scoped, tag = 'input window, operand 0, single buffered']
    #allocation3 [shape = 's32[1]{0}', space=sflag, size = 0x4, scoped, tag = 'scoped memory for tpu_custom_call.1']
    #allocation4 [shape = 's32[1]{0}', space=sflag, size = 0x4, scoped, tag = 'scoped memory for tpu_custom_call.1']
    #allocation5 [shape = 'u8[4096]{0}', space=vmem, size = 0x1000, scoped, tag = 'input window, operand 1, single buffered']
    #allocation6 [shape = 's32[1]{0}', space=sflag, size = 0x4, scoped, tag = 'scoped memory for tpu_custom_call.1']
    #allocation7 [shape = 'u8[8192]{0}', space=vmem, size = 0x2000, scoped, tag = 'input window, operand 2, single buffered']
    #allocation8 [shape = 'u8[65536]{0}', space=vmem, size = 0x10000, scoped, tag = 'input window, operand 3, single buffered']
    #allocation9 [shape = 's32[1]{0}', space=sflag, size = 0x4, scoped, tag = 'scoped memory for tpu_custom_call.1']
    #allocation10 [shape = 'u8[131072]{0}', space=vmem, size = 0x20000, scoped, tag = 'input window, operand 5, single buffered']
    #allocation11 [shape = 'u8[32768]{0}', space=vmem, size = 0x8000, scoped, tag = 'input window, operand 7, single buffered']
    #allocation12 [shape = 's32[1]{0}', space=sflag, size = 0x4, scoped, tag = 'scoped memory for tpu_custom_call.1']
    #allocation13 [shape = 'u8[12288]{0}', space=vmem, size = 0x3000, scoped, tag = 'output window, operand 0, single buffered']
    %14 = vsyncpa [#allocation3], 0
    %15 = vsyncpa [#allocation6], 0
    %16 = vsyncpa [#allocation9], 0
    %17 = vsyncpa [#allocation12], 0
    %18 = vsyncpa [#allocation4], 0
    // Predicated region
    $region2: #{tpu_custom_call.1} parent=1 // pred_check
      _
    $region3: #{tpu_custom_call.1} parent=1 // pred_check_branch
      %20 = sbr.rel (0) target = $region5
    $region4: #{tpu_custom_call.1} parent=1 // pred_region
      %s22 = ssub.s32 128, 128
      %23 = vsyncadd [#allocation3], %s22
      %s25 = sshll.u32 [#allocation2], 4
      %s26 = int_to_ptr.vmem [resolvable:$true] %s25
      %28 = dma.hbm_to_vmem [thread:$0]  %s0, 128, %s26, [#allocation3]
    $region5: #{tpu_custom_call.1} parent=1 // pred_fallthru
      _
    // Predicated region
    $region6: #{tpu_custom_call.1} parent=1 // pred_check
      _
    $region7: #{tpu_custom_call.1} parent=1 // pred_check_branch
      %30 = sbr.rel (0) target = $region9
    $region8: #{tpu_custom_call.1} parent=1 // pred_region
      %s32 = ssub.s32 128, 128
      %33 = vsyncadd [#allocation6], %s32
      %s35 = sshll.u32 [#allocation5], 4
      %s36 = int_to_ptr.vmem [resolvable:$true] %s35
      %38 = dma.hbm_to_vmem [thread:$0]  %s1, 128, %s36, [#allocation6]
    $region9: #{tpu_custom_call.1} parent=1 // pred_fallthru
      _
    // Predicated region
    $region10: #{tpu_custom_call.1} parent=1 // pred_check
      _
    $region11: #{tpu_custom_call.1} parent=1 // pred_check_branch
      %40 = sbr.rel (0) target = $region13
    $region12: #{tpu_custom_call.1} parent=1 // pred_region
      %s42 = ssub.s32 256, 256
      %43 = vsyncadd [#allocation6], %s42
      %s45 = sshll.u32 [#allocation7], 4
      %s46 = int_to_ptr.vmem [resolvable:$true] %s45
      %48 = dma.hbm_to_vmem [thread:$0]  %s2, 256, %s46, [#allocation6]
    $region13: #{tpu_custom_call.1} parent=1 // pred_fallthru
      _
    // Predicated region
    $region14: #{tpu_custom_call.1} parent=1 // pred_check
      _
    $region15: #{tpu_custom_call.1} parent=1 // pred_check_branch
      %50 = sbr.rel (0) target = $region17
    $region16: #{tpu_custom_call.1} parent=1 // pred_region
      %s52 = ssub.s32 2048, 2048
      %53 = vsyncadd [#allocation9], %s52
      %s54 = sshll.u32 [#allocation8], 4
      %s55 = int_to_ptr.vmem [resolvable:$true] %s54
      %60 = dma.hbm_to_vmem [thread:$0]  %s3, 2048, %s55, [#allocation9], 128, 128, 8
    $region17: #{tpu_custom_call.1} parent=1 // pred_fallthru
      _
    // Predicated region
    $region18: #{tpu_custom_call.1} parent=1 // pred_check
      _
    $region19: #{tpu_custom_call.1} parent=1 // pred_check_branch
      %62 = sbr.rel (0) target = $region21
    $region20: #{tpu_custom_call.1} parent=1 // pred_region
      _
    $region21: #{tpu_custom_call.1} parent=1 // pred_fallthru
      _
    // Predicated region
    $region22: #{tpu_custom_call.1} parent=1 // pred_check
      _
    $region23: #{tpu_custom_call.1} parent=1 // pred_check_branch
      %64 = sbr.rel (0) target = $region25
    $region24: #{tpu_custom_call.1} parent=1 // pred_region
      %s66 = ssub.s32 4096, 4096
      %67 = vsyncadd [#allocation9], %s66
      %s68 = sshll.u32 [#allocation10], 4
      %s69 = int_to_ptr.vmem [resolvable:$true] %s68
      %74 = dma.hbm_to_vmem [thread:$0]  %s5, 4096, %s69, [#allocation9], 128, 128, 8
    $region25: #{tpu_custom_call.1} parent=1 // pred_fallthru
      _
    // Predicated region
    $region26: #{tpu_custom_call.1} parent=1 // pred_check
      _
    $region27: #{tpu_custom_call.1} parent=1 // pred_check_branch
      %76 = sbr.rel (0) target = $region29
    $region28: #{tpu_custom_call.1} parent=1 // pred_region
      _
    $region29: #{tpu_custom_call.1} parent=1 // pred_fallthru
      _
    // Predicated region
    $region30: #{tpu_custom_call.1} parent=1 // pred_check
      _
    $region31: #{tpu_custom_call.1} parent=1 // pred_check_branch
      %78 = sbr.rel (0) target = $region33
    $region32: #{tpu_custom_call.1} parent=1 // pred_region
      %s80 = ssub.s32 1024, 1024
      %81 = vsyncadd [#allocation12], %s80
      %s82 = sshll.u32 [#allocation11], 4
      %s83 = int_to_ptr.vmem [resolvable:$true] %s82
      %88 = dma.hbm_to_vmem [thread:$0]  %s7, 1024, %s83, [#allocation12], 64, 64, 4
    $region33: #{tpu_custom_call.1} parent=1 // pred_fallthru
      _
    // Predicated region
    $region34: #{tpu_custom_call.1} parent=1 // pred_check
      _
    $region35: #{tpu_custom_call.1} parent=1 // pred_check_branch
      %90 = sbr.rel (0) target = $region37
    $region36: #{tpu_custom_call.1} parent=1 // pred_region
      _
    $region37: #{tpu_custom_call.1} parent=1 // pred_fallthru
      _
    // Predicated region
    $region38: #{tpu_custom_call.1} parent=1 // pred_check
      _
    $region39: #{tpu_custom_call.1} parent=1 // pred_check_branch
      %92 = sbr.rel (0) target = $region41
    $region40: #{tpu_custom_call.1} parent=1 // pred_region
      %93 = dma.done [#allocation3], 128
    $region41: #{tpu_custom_call.1} parent=1 // pred_fallthru
      _
    // Predicated region
    $region42: #{tpu_custom_call.1} parent=1 // pred_check
      _
    $region43: #{tpu_custom_call.1} parent=1 // pred_check_branch
      %95 = sbr.rel (0) target = $region45
    $region44: #{tpu_custom_call.1} parent=1 // pred_region
      %96 = dma.done [#allocation6], 128
    $region45: #{tpu_custom_call.1} parent=1 // pred_fallthru
      _
    // Predicated region
    $region46: #{tpu_custom_call.1} parent=1 // pred_check
      _
    $region47: #{tpu_custom_call.1} parent=1 // pred_check_branch
      %98 = sbr.rel (0) target = $region49
    $region48: #{tpu_custom_call.1} parent=1 // pred_region
      %99 = dma.done [#allocation6], 256
    $region49: #{tpu_custom_call.1} parent=1 // pred_fallthru
      _
    // Predicated region
    $region50: #{tpu_custom_call.1} parent=1 // pred_check
      _
    $region51: #{tpu_custom_call.1} parent=1 // pred_check_branch
      %101 = sbr.rel (0) target = $region53
    $region52: #{tpu_custom_call.1} parent=1 // pred_region
      %102 = dma.done [#allocation9], 2048
    $region53: #{tpu_custom_call.1} parent=1 // pred_fallthru
      _
    // Predicated region
    $region54: #{tpu_custom_call.1} parent=1 // pred_check
      _
    $region55: #{tpu_custom_call.1} parent=1 // pred_check_branch
      %104 = sbr.rel (0) target = $region57
    $region56: #{tpu_custom_call.1} parent=1 // pred_region
      %105 = dma.done [#allocation9], 4096
    $region57: #{tpu_custom_call.1} parent=1 // pred_fallthru
      _
    // Predicated region
    $region58: #{tpu_custom_call.1} parent=1 // pred_check
      _
    $region59: #{tpu_custom_call.1} parent=1 // pred_check_branch
      %107 = sbr.rel (0) target = $region61
    $region60: #{tpu_custom_call.1} parent=1 // pred_region
      %108 = dma.done [#allocation12], 1024
    $region61: #{tpu_custom_call.1} parent=1 // pred_fallthru
      _
    %v110 = vld [vmem:[#allocation7] sm:$0xff]
    %v111 = vld [vmem:[#allocation7 + $0x8] sm:$0xff]
    %v112 = vld [vmem:[#allocation2] sm:$0xff]
    %v113 = vpack.c.bf16 %v112, %v112
    %v114 = vld [vmem:[#allocation8] sm:$0xff]
    %v115 = vld [vmem:[#allocation8 + $0x8] sm:$0xff]
    %v116 = vld [vmem:[#allocation8 + $0x10] sm:$0xff]
    %v117 = vld [vmem:[#allocation8 + $0x18] sm:$0xff]
    %v118 = vld [vmem:[#allocation8 + $0x20] sm:$0xff]
    %v119 = vld [vmem:[#allocation8 + $0x28] sm:$0xff]
    %v120 = vld [vmem:[#allocation8 + $0x30] sm:$0xff]
    %v121 = vld [vmem:[#allocation8 + $0x38] sm:$0xff]
    %v122 = vld [vmem:[#allocation8 + $0x40] sm:$0xff]
    %v123 = vld [vmem:[#allocation8 + $0x48] sm:$0xff]
    %v124 = vld [vmem:[#allocation8 + $0x50] sm:$0xff]
    %v125 = vld [vmem:[#allocation8 + $0x58] sm:$0xff]
    %v126 = vld [vmem:[#allocation8 + $0x60] sm:$0xff]
    %v127 = vld [vmem:[#allocation8 + $0x68] sm:$0xff]
    %v128 = vld [vmem:[#allocation8 + $0x70] sm:$0xff]
    %v129 = vld [vmem:[#allocation8 + $0x78] sm:$0xff]
    %v130 = vld [vmem:[%s4] sm:$0x3]
    %v132 = vlaneseq
    %v133 = vshrl.u32 %v132, 7
    %v134 = vsub.s32 0, %v133
    %v135 = vrot.slane %v130, %v134
    %v136 = vlaneseq
    %v137 = vshrl.u32 %v136, 7
    %v138 = vsub.s32 1, %v137
    %v139 = vrot.slane %v130, %v138
    %v158 = vunpack.c.l.b16 %v114
    %v159 = vunpack.c.h.b16 %v114
    %v160 = vunpack.c.l.b16 %v115
    %v161 = vunpack.c.h.b16 %v115
    %v162 = vunpack.c.l.b16 %v116
    %v163 = vunpack.c.h.b16 %v116
    %v164 = vunpack.c.l.b16 %v117
    %v165 = vunpack.c.h.b16 %v117
    %v166 = vunpack.c.l.b16 %v118
    %v167 = vunpack.c.h.b16 %v118
    %v168 = vunpack.c.l.b16 %v119
    %v169 = vunpack.c.h.b16 %v119
    %v170 = vunpack.c.l.b16 %v120
    %v171 = vunpack.c.h.b16 %v120
    %v172 = vunpack.c.l.b16 %v121
    %v173 = vunpack.c.h.b16 %v121
    %v174 = vunpack.c.l.b16 %v122
    %v175 = vunpack.c.h.b16 %v122
    %v176 = vunpack.c.l.b16 %v123
    %v177 = vunpack.c.h.b16 %v123
    %v178 = vunpack.c.l.b16 %v124
    %v179 = vunpack.c.h.b16 %v124
    %v180 = vunpack.c.l.b16 %v125
    %v181 = vunpack.c.h.b16 %v125
    %v182 = vunpack.c.l.b16 %v126
    %v183 = vunpack.c.h.b16 %v126
    %v184 = vunpack.c.l.b16 %v127
    %v185 = vunpack.c.h.b16 %v127
    %v186 = vunpack.c.l.b16 %v128
    %v187 = vunpack.c.h.b16 %v128
    %v188 = vunpack.c.l.b16 %v129
    %v189 = vunpack.c.h.b16 %v129
    %v190 = vpack.c.b16 %v160, %v158
    %v191 = vpack.c.b16 %v161, %v159
    %v192 = vpack.c.b16 %v164, %v162
    %v193 = vpack.c.b16 %v165, %v163
    %v194 = vpack.c.b16 %v168, %v166
    %v195 = vpack.c.b16 %v169, %v167
    %v196 = vpack.c.b16 %v172, %v170
    %v197 = vpack.c.b16 %v173, %v171
    %v198 = vpack.c.b16 %v176, %v174
    %v199 = vpack.c.b16 %v177, %v175
    %v200 = vpack.c.b16 %v180, %v178
    %v201 = vpack.c.b16 %v181, %v179
    %v202 = vpack.c.b16 %v184, %v182
    %v203 = vpack.c.b16 %v185, %v183
    %v204 = vpack.c.b16 %v188, %v186
    %v205 = vpack.c.b16 %v189, %v187
    %222 = vmatprep.subr.bf16.mxu0 %v191
    %223 = vmatpush1.bf16.msra.mxu0 %v190
    %224 = vmatprep.subr.bf16.mxu0 %v193
    %225 = vmatpush1.bf16.msra.mxu0 %v192
    %226 = vmatprep.subr.bf16.mxu0 %v195
    %227 = vmatpush1.bf16.msra.mxu0 %v194
    %228 = vmatprep.subr.bf16.mxu0 %v197
    %229 = vmatpush1.bf16.msra.mxu0 %v196
    %230 = vmatprep.subr.bf16.mxu0 %v199
    %231 = vmatpush1.bf16.msra.mxu0 %v198
    %232 = vmatprep.subr.bf16.mxu0 %v201
    %233 = vmatpush1.bf16.msra.mxu0 %v200
    %234 = vmatprep.subr.bf16.mxu0 %v203
    %235 = vmatpush1.bf16.msra.mxu0 %v202
    %236 = vmatprep.subr.bf16.mxu0 %v205
    %237 = vmatpush1.bf16.msra.mxu0 %v204
    %238 = vmatprep.subr.bf16.mxu0 0
    %239 = vmatpush1.bf16.msra.mxu0 0
    %240 = vmatprep.subr.bf16.mxu0 0
    %241 = vmatpush1.bf16.msra.mxu0 0
    %242 = vmatprep.subr.bf16.mxu0 0
    %243 = vmatpush1.bf16.msra.mxu0 0
    %244 = vmatprep.subr.bf16.mxu0 0
    %245 = vmatpush1.bf16.msra.mxu0 0
    %246 = vmatprep.subr.bf16.mxu0 0
    %247 = vmatpush1.bf16.msra.mxu0 0
    %248 = vmatprep.subr.bf16.mxu0 0
    %249 = vmatpush1.bf16.msra.mxu0 0
    %250 = vmatprep.subr.bf16.mxu0 0
    %251 = vmatpush1.bf16.msra.mxu0 0
    %252 = vmatprep.subr.bf16.mxu0 0
    %253 = vmatpush1.bf16.msra.mxu0 0
    %254 = vmatprep.mubr.bf16.mxu0 0
    %255 = vmatmul.mubr.bf16.gmra.mrb[0].mxu0 %v113
    %v256 = vpop.f32.mrb[0].mxu0
    %v257 = vadd.f32 %v135, %v256
    %v258 = vpop.f32.mrb[0].mxu0
    %v259 = vadd.f32 %v139, %v258
    %v260 = vpop.f32.mrb[0].mxu0
    %v261 = vpop.f32.mrb[0].mxu0
    %262 = vdwg.mxu0
    %v263 = vmul.f32 %v259, 0.5
    %v264 = vmul.f32 %v263, 1.442695
    %v265 = vpow.pop %v264
    %v266 = vmul.f32 %v265, %v265
    %v267 = vmul.f32 %v265, %v110
    %v268 = vadd.f32 %v257, %v267
    %269 = vst [vmem:[#allocation13] sm:$0xff] %v268
    %270 = vst [vmem:[#allocation13 + $0x8] sm:$0xff] %v257
    %v271 = vpack.c.bf16 %v268, %v268
    %v272 = vpack.c.bf16 %v111, %v111
    %v273 = vld [vmem:[#allocation10] sm:$0xff]
    %v274 = vld [vmem:[#allocation10 + $0x8] sm:$0xff]
    %v275 = vld [vmem:[#allocation10 + $0x10] sm:$0xff]
    %v276 = vld [vmem:[#allocation10 + $0x18] sm:$0xff]
    %v277 = vld [vmem:[#allocation10 + $0x20] sm:$0xff]
    %v278 = vld [vmem:[#allocation10 + $0x28] sm:$0xff]
    %v279 = vld [vmem:[#allocation10 + $0x30] sm:$0xff]
    %v280 = vld [vmem:[#allocation10 + $0x38] sm:$0xff]
    %v281 = vld [vmem:[#allocation10 + $0x40] sm:$0xff]
    %v282 = vld [vmem:[#allocation10 + $0x48] sm:$0xff]
    %v283 = vld [vmem:[#allocation10 + $0x50] sm:$0xff]
    %v284 = vld [vmem:[#allocation10 + $0x58] sm:$0xff]
    %v285 = vld [vmem:[#allocation10 + $0x60] sm:$0xff]
    %v286 = vld [vmem:[#allocation10 + $0x68] sm:$0xff]
    %v287 = vld [vmem:[#allocation10 + $0x70] sm:$0xff]
    %v288 = vld [vmem:[#allocation10 + $0x78] sm:$0xff]
    %v289 = vld [vmem:[#allocation10 + $0x80] sm:$0xff]
    %v290 = vld [vmem:[#allocation10 + $0x88] sm:$0xff]
    %v291 = vld [vmem:[#allocation10 + $0x90] sm:$0xff]
    %v292 = vld [vmem:[#allocation10 + $0x98] sm:$0xff]
    %v293 = vld [vmem:[#allocation10 + $0xa0] sm:$0xff]
    %v294 = vld [vmem:[#allocation10 + $0xa8] sm:$0xff]
    %v295 = vld [vmem:[#allocation10 + $0xb0] sm:$0xff]
    %v296 = vld [vmem:[#allocation10 + $0xb8] sm:$0xff]
    %v297 = vld [vmem:[#allocation10 + $0xc0] sm:$0xff]
    %v298 = vld [vmem:[#allocation10 + $0xc8] sm:$0xff]
    %v299 = vld [vmem:[#allocation10 + $0xd0] sm:$0xff]
    %v300 = vld [vmem:[#allocation10 + $0xd8] sm:$0xff]
    %v301 = vld [vmem:[#allocation10 + $0xe0] sm:$0xff]
    %v302 = vld [vmem:[#allocation10 + $0xe8] sm:$0xff]
    %v303 = vld [vmem:[#allocation10 + $0xf0] sm:$0xff]
    %v304 = vld [vmem:[#allocation10 + $0xf8] sm:$0xff]
    %v305 = vld [vmem:[%s6] sm:$0x3]
    %v307 = vlaneseq
    %v308 = vshrl.u32 %v307, 7
    %v309 = vsub.s32 0, %v308
    %v310 = vrot.slane %v305, %v309
    %v311 = vlaneseq
    %v312 = vshrl.u32 %v311, 7
    %v313 = vsub.s32 1, %v312
    %v314 = vrot.slane %v305, %v313
    %v349 = vunpack.c.l.b16 %v273
    %v350 = vunpack.c.h.b16 %v273
    %v351 = vunpack.c.l.b16 %v274
    %v352 = vunpack.c.h.b16 %v274
    %v353 = vunpack.c.l.b16 %v275
    %v354 = vunpack.c.h.b16 %v275
    %v355 = vunpack.c.l.b16 %v276
    %v356 = vunpack.c.h.b16 %v276
    %v357 = vunpack.c.l.b16 %v277
    %v358 = vunpack.c.h.b16 %v277
    %v359 = vunpack.c.l.b16 %v278
    %v360 = vunpack.c.h.b16 %v278
    %v361 = vunpack.c.l.b16 %v279
    %v362 = vunpack.c.h.b16 %v279
    %v363 = vunpack.c.l.b16 %v280
    %v364 = vunpack.c.h.b16 %v280
    %v365 = vunpack.c.l.b16 %v281
    %v366 = vunpack.c.h.b16 %v281
    %v367 = vunpack.c.l.b16 %v282
    %v368 = vunpack.c.h.b16 %v282
    %v369 = vunpack.c.l.b16 %v283
    %v370 = vunpack.c.h.b16 %v283
    %v371 = vunpack.c.l.b16 %v284
    %v372 = vunpack.c.h.b16 %v284
    %v373 = vunpack.c.l.b16 %v285
    %v374 = vunpack.c.h.b16 %v285
    %v375 = vunpack.c.l.b16 %v286
    %v376 = vunpack.c.h.b16 %v286
    %v377 = vunpack.c.l.b16 %v287
    %v378 = vunpack.c.h.b16 %v287
    %v379 = vunpack.c.l.b16 %v288
    %v380 = vunpack.c.h.b16 %v288
    %v381 = vunpack.c.l.b16 %v289
    %v382 = vunpack.c.h.b16 %v289
    %v383 = vunpack.c.l.b16 %v290
    %v384 = vunpack.c.h.b16 %v290
    %v385 = vunpack.c.l.b16 %v291
    %v386 = vunpack.c.h.b16 %v291
    %v387 = vunpack.c.l.b16 %v292
    %v388 = vunpack.c.h.b16 %v292
    %v389 = vunpack.c.l.b16 %v293
    %v390 = vunpack.c.h.b16 %v293
    %v391 = vunpack.c.l.b16 %v294
    %v392 = vunpack.c.h.b16 %v294
    %v393 = vunpack.c.l.b16 %v295
    %v394 = vunpack.c.h.b16 %v295
    %v395 = vunpack.c.l.b16 %v296
    %v396 = vunpack.c.h.b16 %v296
    %v397 = vunpack.c.l.b16 %v297
    %v398 = vunpack.c.h.b16 %v297
    %v399 = vunpack.c.l.b16 %v298
    %v400 = vunpack.c.h.b16 %v298
    %v401 = vunpack.c.l.b16 %v299
    %v402 = vunpack.c.h.b16 %v299
    %v403 = vunpack.c.l.b16 %v300
    %v404 = vunpack.c.h.b16 %v300
    %v405 = vunpack.c.l.b16 %v301
    %v406 = vunpack.c.h.b16 %v301
    %v407 = vunpack.c.l.b16 %v302
    %v408 = vunpack.c.h.b16 %v302
    %v409 = vunpack.c.l.b16 %v303
    %v410 = vunpack.c.h.b16 %v303
    %v411 = vunpack.c.l.b16 %v304
    %v412 = vunpack.c.h.b16 %v304
    %v413 = vpack.c.b16 %v351, %v349
    %v414 = vpack.c.b16 %v352, %v350
    %v415 = vpack.c.b16 %v355, %v353
    %v416 = vpack.c.b16 %v356, %v354
    %v417 = vpack.c.b16 %v359, %v357
    %v418 = vpack.c.b16 %v360, %v358
    %v419 = vpack.c.b16 %v363, %v361
    %v420 = vpack.c.b16 %v364, %v362
    %v421 = vpack.c.b16 %v367, %v365
    %v422 = vpack.c.b16 %v368, %v366
    %v423 = vpack.c.b16 %v371, %v369
    %v424 = vpack.c.b16 %v372, %v370
    %v425 = vpack.c.b16 %v375, %v373
    %v426 = vpack.c.b16 %v376, %v374
    %v427 = vpack.c.b16 %v379, %v377
    %v428 = vpack.c.b16 %v380, %v378
    %v429 = vpack.c.b16 %v383, %v381
    %v430 = vpack.c.b16 %v384, %v382
    %v431 = vpack.c.b16 %v387, %v385
    %v432 = vpack.c.b16 %v388, %v386
    %v433 = vpack.c.b16 %v391, %v389
    %v434 = vpack.c.b16 %v392, %v390
    %v435 = vpack.c.b16 %v395, %v393
    %v436 = vpack.c.b16 %v396, %v394
    %v437 = vpack.c.b16 %v399, %v397
    %v438 = vpack.c.b16 %v400, %v398
    %v439 = vpack.c.b16 %v403, %v401
    %v440 = vpack.c.b16 %v404, %v402
    %v441 = vpack.c.b16 %v407, %v405
    %v442 = vpack.c.b16 %v408, %v406
    %v443 = vpack.c.b16 %v411, %v409
    %v444 = vpack.c.b16 %v412, %v410
    %477 = vmatprep.subr.bf16.mxu0 %v414
    %478 = vmatpush1.bf16.msra.mxu0 %v413
    %479 = vmatprep.subr.bf16.mxu0 %v416
    %480 = vmatpush1.bf16.msra.mxu0 %v415
    %481 = vmatprep.subr.bf16.mxu0 %v418
    %482 = vmatpush1.bf16.msra.mxu0 %v417
    %483 = vmatprep.subr.bf16.mxu0 %v420
    %484 = vmatpush1.bf16.msra.mxu0 %v419
    %485 = vmatprep.subr.bf16.mxu0 %v422
    %486 = vmatpush1.bf16.msra.mxu0 %v421
    %487 = vmatprep.subr.bf16.mxu0 %v424
    %488 = vmatpush1.bf16.msra.mxu0 %v423
    %489 = vmatprep.subr.bf16.mxu0 %v426
    %490 = vmatpush1.bf16.msra.mxu0 %v425
    %491 = vmatprep.subr.bf16.mxu0 %v428
    %492 = vmatpush1.bf16.msra.mxu0 %v427
    %493 = vmatprep.subr.bf16.mxu0 %v430
    %494 = vmatpush1.bf16.msra.mxu0 %v429
    %495 = vmatprep.subr.bf16.mxu0 %v432
    %496 = vmatpush1.bf16.msra.mxu0 %v431
    %497 = vmatprep.subr.bf16.mxu0 %v434
    %498 = vmatpush1.bf16.msra.mxu0 %v433
    %499 = vmatprep.subr.bf16.mxu0 %v436
    %500 = vmatpush1.bf16.msra.mxu0 %v435
    %501 = vmatprep.subr.bf16.mxu0 %v438
    %502 = vmatpush1.bf16.msra.mxu0 %v437
    %503 = vmatprep.subr.bf16.mxu0 %v440
    %504 = vmatpush1.bf16.msra.mxu0 %v439
    %505 = vmatprep.subr.bf16.mxu0 %v442
    %506 = vmatpush1.bf16.msra.mxu0 %v441
    %507 = vmatprep.subr.bf16.mxu0 %v444
    %508 = vmatpush1.bf16.msra.mxu0 %v443
    %509 = vmatprep.mubr.bf16.mxu0 %v272
    %510 = vmatmul.mubr.bf16.gmra.mrb[0].mxu0 %v271
    %v511 = vpop.f32.mrb[0].mxu0
    %v512 = vadd.f32 %v310, %v511
    %v513 = vpop.f32.mrb[0].mxu0
    %v514 = vadd.f32 %v314, %v513
    %v515 = vpop.f32.mrb[0].mxu0
    %v516 = vpop.f32.mrb[0].mxu0
    %517 = vdwg.mxu0
    %v518 = vtanh.pop %v514
    %v519 = vld [vmem:[#allocation5] sm:$0xff]
    %v520 = vsub.f32 %v512, %v519
    %v521 = vmul.f32 %v520, %v520
    %522 = vadd.xlane.f32.xlu0 %v521
    %v523 = vpop.xlane.xlu0 %522
    %v524 = vadd.f32 %v259, 1.0
    %v525 = vmul.f32 %v257, %v257
    %v526 = vsub.f32 %v524, %v525
    %v527 = vsub.f32 %v526, %v266
    %528 = vadd.xlane.f32.xlu0 %v527
    %v529 = vpop.xlane.xlu0 %528
    %v530 = vmul.f32 %v529, -0.5
    %v531 = vpack.c.bf16 %v518, %v518
    %v532 = vld [vmem:[#allocation11] sm:$0xf]
    %v533 = vld [vmem:[#allocation11 + $0x4] sm:$0xf]
    %v534 = vld [vmem:[#allocation11 + $0x8] sm:$0xf]
    %v535 = vld [vmem:[#allocation11 + $0xc] sm:$0xf]
    %v536 = vld [vmem:[#allocation11 + $0x10] sm:$0xf]
    %v537 = vld [vmem:[#allocation11 + $0x14] sm:$0xf]
    %v538 = vld [vmem:[#allocation11 + $0x18] sm:$0xf]
    %v539 = vld [vmem:[#allocation11 + $0x1c] sm:$0xf]
    %v540 = vld [vmem:[#allocation11 + $0x20] sm:$0xf]
    %v541 = vld [vmem:[#allocation11 + $0x24] sm:$0xf]
    %v542 = vld [vmem:[#allocation11 + $0x28] sm:$0xf]
    %v543 = vld [vmem:[#allocation11 + $0x2c] sm:$0xf]
    %v544 = vld [vmem:[#allocation11 + $0x30] sm:$0xf]
    %v545 = vld [vmem:[#allocation11 + $0x34] sm:$0xf]
    %v546 = vld [vmem:[#allocation11 + $0x38] sm:$0xf]
    %v547 = vld [vmem:[#allocation11 + $0x3c] sm:$0xf]
    %v548 = vld [vmem:[%s8] sm:$0x1]
    %v550 = vlaneseq
    %v551 = vshrl.u32 %v550, 7
    %v552 = vsub.s32 0, %v551
    %v553 = vrot.slane %v548, %v552
    %v571 = vunpack.c.l.b16 %v532
    %v572 = vunpack.c.l.b16 %v533
    %v573 = vunpack.c.l.b16 %v534
    %v574 = vunpack.c.l.b16 %v535
    %v575 = vunpack.c.l.b16 %v536
    %v576 = vunpack.c.l.b16 %v537
    %v577 = vunpack.c.l.b16 %v538
    %v578 = vunpack.c.l.b16 %v539
    %v579 = vunpack.c.l.b16 %v540
    %v580 = vunpack.c.l.b16 %v541
    %v581 = vunpack.c.l.b16 %v542
    %v582 = vunpack.c.l.b16 %v543
    %v583 = vunpack.c.l.b16 %v544
    %v584 = vunpack.c.l.b16 %v545
    %v585 = vunpack.c.l.b16 %v546
    %v586 = vunpack.c.l.b16 %v547
    %v587 = vpack.c.b16 %v572, %v571
    %v588 = vpack.c.b16 %v574, %v573
    %v589 = vpack.c.b16 %v576, %v575
    %v590 = vpack.c.b16 %v578, %v577
    %v591 = vpack.c.b16 %v580, %v579
    %v592 = vpack.c.b16 %v582, %v581
    %v593 = vpack.c.b16 %v584, %v583
    %v594 = vpack.c.b16 %v586, %v585
    %603 = vmatprep.subr.bf16.mxu0 0
    %604 = vmatpush1.bf16.msra.mxu0 %v587
    %605 = vmatprep.subr.bf16.mxu0 0
    %606 = vmatpush1.bf16.msra.mxu0 %v588
    %607 = vmatprep.subr.bf16.mxu0 0
    %608 = vmatpush1.bf16.msra.mxu0 %v589
    %609 = vmatprep.subr.bf16.mxu0 0
    %610 = vmatpush1.bf16.msra.mxu0 %v590
    %611 = vmatprep.subr.bf16.mxu0 0
    %612 = vmatpush1.bf16.msra.mxu0 %v591
    %613 = vmatprep.subr.bf16.mxu0 0
    %614 = vmatpush1.bf16.msra.mxu0 %v592
    %615 = vmatprep.subr.bf16.mxu0 0
    %616 = vmatpush1.bf16.msra.mxu0 %v593
    %617 = vmatprep.subr.bf16.mxu0 0
    %618 = vmatpush1.bf16.msra.mxu0 %v594
    %619 = vmatprep.subr.bf16.mxu0 0
    %620 = vmatpush1.bf16.msra.mxu0 0
    %621 = vmatprep.subr.bf16.mxu0 0
    %622 = vmatpush1.bf16.msra.mxu0 0
    %623 = vmatprep.subr.bf16.mxu0 0
    %624 = vmatpush1.bf16.msra.mxu0 0
    %625 = vmatprep.subr.bf16.mxu0 0
    %626 = vmatpush1.bf16.msra.mxu0 0
    %627 = vmatprep.subr.bf16.mxu0 0
    %628 = vmatpush1.bf16.msra.mxu0 0
    %629 = vmatprep.subr.bf16.mxu0 0
    %630 = vmatpush1.bf16.msra.mxu0 0
    %631 = vmatprep.subr.bf16.mxu0 0
    %632 = vmatpush1.bf16.msra.mxu0 0
    %633 = vmatprep.subr.bf16.mxu0 0
    %634 = vmatpush1.bf16.msra.mxu0 0
    %635 = vmatprep.mubr.bf16.mxu0 0
    %636 = vmatmul.mubr.bf16.gmra.mrb[0].mxu0 %v531
    %v637 = vpop.f32.mrb[0].mxu0
    %v638 = vadd.f32 %v553, %v637
    %v639 = vpop.f32.mrb[0].mxu0
    %v640 = vpop.f32.mrb[0].mxu0
    %v641 = vpop.f32.mrb[0].mxu0
    %642 = vdwg.mxu0
    %v643 = vsub.f32 %v638, %v111
    %v644 = vmul.f32 %v643, %v643
    %645 = vadd.xlane.f32.xlu0 %v644
    %v646 = vpop.xlane.xlu0 %645
    %v647 = vmul.f32 %v646, 0.015625
    %v648 = vlaneseq
    %v649 = vand.u32 %v648, 127
    %vm650 = vcmp.eq.s32.totalorder %v649, 0
    %vm651 = vcmp.eq.s32.totalorder %v649, 1
    %vm652 = vcmp.eq.s32.totalorder %v649, 2
    %v653 = vsel %vm652, %v647, 0.0
    %v654 = vsel %vm651, %v530, %v653
    %v655 = vsel %vm650, %v523, %v654
    %656 = vst [vmem:[#allocation13 + $0x10] sm:$0xff] %v655
    // Predicated region
    $region62: #{tpu_custom_call.1} parent=1 // pred_check
      _
    $region63: #{tpu_custom_call.1} parent=1 // pred_check_branch
      %658 = sbr.rel (0) target = $region65
    $region64: #{tpu_custom_call.1} parent=1 // pred_region
      %s660 = ssub.s32 384, 384
      %661 = vsyncadd [#allocation4], %s660
      %s663 = sshll.u32 [#allocation13], 4
      %s664 = int_to_ptr.vmem [resolvable:$true] %s663
      %666 = dma.vmem_to_hbm [thread:$0]  %s664, 384, %s9, [#allocation4]
    $region65: #{tpu_custom_call.1} parent=1 // pred_fallthru
      _
    // Predicated region
    $region66: #{tpu_custom_call.1} parent=1 // pred_check
      _
    $region67: #{tpu_custom_call.1} parent=1 // pred_check_branch
      %668 = sbr.rel (0) target = $region69
    $region68: #{tpu_custom_call.1} parent=1 // pred_region
      %669 = dma.done [#allocation4], 384
    $region69: #{tpu_custom_call.1} parent=1 // pred_fallthru
      _
    %670 = vsyncpa [#allocation3], 1
    %671 = vsyncpa [#allocation6], 1
    %672 = vsyncpa [#allocation9], 1
    %673 = vsyncpa [#allocation12], 1
    %674 = vsyncpa [#allocation4], 1

</llo_original>
